<compile_context>
chip_gen: v7x
topology: tpu7x:2x2x1
jax: 0.10.0
libtpu: 0.0.40
codegen_flags: <defaults>
</compile_context>

<pallas_src>
import jax
import jax.numpy as jnp
from jax.experimental import pallas as pl
from jax.experimental.pallas import tpu as pltpu

BN_EPS = 1e-5


def _round_up(x, m):
    return (x + m - 1) // m * m


def _mlp_kernel(x_ref, w1_ref, wh_ref, w3_ref, b3_ref, o_ref):
    # x_ref : (TB, F_pad)   f32   (batch tile)
    # w1_ref: (F_pad, H)    bf16  (BN scale pre-folded, zero-padded)
    # wh_ref: (L, H, H)     bf16  (stacked hidden layers, BN folded)
    # w3_ref: (1, H)        f32   (head row, zero-padded)
    # b3_ref: (1, 1)        f32   in SMEM
    # o_ref : (TB, 128)     f32   (lane-dense padded head tile)

    x = x_ref[...]

    # Layer 0: Linear(in, H, bias=False) -> folded BN -> ReLU -> Dropout(id)
    h = jnp.dot(x.astype(jnp.bfloat16), w1_ref[...],
                preferred_element_type=jnp.float32)
    h = jnp.maximum(h, 0.0)

    # Hidden layers: Linear(H, H, bias=False) -> folded BN -> ReLU -> Dropout(id)
    # Static unrolled loop (wh_ref.shape[0] is compile-time).
    for l in range(wh_ref.shape[0]):
        h = jnp.dot(h.astype(jnp.bfloat16), wh_ref[l],
                    preferred_element_type=jnp.float32)
        h = jnp.maximum(h, 0.0)

    # Head: Linear(H, 1, bias=True) -> Sigmoid.
    # N=1 output: VPU multiply + lane reduce instead of an N=1 MXU matmul.
    logit = jnp.sum(h * w3_ref[...], axis=-1, keepdims=True) + b3_ref[0, 0]
    o_ref[...] = jnp.broadcast_to(jax.nn.sigmoid(logit), o_ref.shape)


def metadata_model_forward(x, params, *, max_batch_tile=512):
    """x: (B, input_size) float32. Returns (B, 1) float32."""
    w1, wh, w3_row, b3 = params
    B, F = x.shape
    F_pad, H = w1.shape
    L = wh.shape[0]

    # batch tile: >=512 rows at scale, shrink for tiny batches (must be /8)
    TB = min(max_batch_tile, _round_up(B, 8))
    B_pad = _round_up(B, TB)

    x_p = jnp.pad(x.astype(jnp.float32),
                  ((0, B_pad - B), (0, F_pad - F)))

    out = pl.pallas_call(
        _mlp_kernel,
        out_shape=jax.ShapeDtypeStruct((B_pad, 128), jnp.float32),
        grid=(B_pad // TB,),
        in_specs=[
            pl.BlockSpec((TB, F_pad), lambda i: (i, 0)),        # x: batch-tiled
            pl.BlockSpec((F_pad, H), lambda i: (0, 0)),         # weights stay
            pl.BlockSpec((L, H, H), lambda i: (0, 0, 0)),       #  VMEM-resident
            pl.BlockSpec((1, H), lambda i: (0, 0)),             # head row
            pl.BlockSpec(memory_space=pltpu.MemorySpace.SMEM),  # b3 scalar
        ],
        out_specs=pl.BlockSpec((TB, 128), lambda i: (i, 0)),
        compiler_params=pltpu.CompilerParams(
            dimension_semantics=("parallel",),   # megacore on v7x
        ),
    )(x_p, w1, wh, w3_row, b3)

    # drop batch padding and the lane padding of the head tile
    return out[:B, :1]


def init_params(key, input_size, hidden_size, num_layers=1):
    """Mirrors MetadataModel.__init__/reset_parameters (xavier_uniform_ on
    Linear weights, BatchNorm1d at default running stats), then folds BN,
    zero-pads feature dims to 128 multiples, and casts matmul weights to bf16."""

    def xavier(k, fan_in, fan_out):
        bound = (6.0 / (fan_in + fan_out)) ** 0.5
        # stored already transposed: (in, out) so the kernel computes x @ W
        return jax.random.uniform(k, (fan_in, fan_out), jnp.float32,
                                  -bound, bound)

    keys = jax.random.split(key, num_layers + 3)
    w1 = xavier(keys[0], input_size, hidden_size)
    wh = [xavier(keys[1 + l], hidden_size, hidden_size)
          for l in range(num_layers)]
    w3 = xavier(keys[num_layers + 1], hidden_size, 1)
    # final Linear bias: PyTorch default U(-1/sqrt(fan_in), 1/sqrt(fan_in))
    bb = 1.0 / float(hidden_size) ** 0.5
    b3 = jax.random.uniform(keys[num_layers + 2], (1, 1), jnp.float32, -bb, bb)

    # Fold eval-mode BatchNorm1d (gamma=1, beta=0, mean=0, var=1) into the
    # weight columns; the shift term is exactly zero and is dropped.
    scale = 1.0 / jnp.sqrt(jnp.float32(1.0 + BN_EPS))
    w1 = w1 * scale
    wh = [w * scale for w in wh]

    # Zero-pad feature dims to lane multiples (exact through ReLU / head dot).
    F_pad = _round_up(input_size, 128)
    H_pad = _round_up(hidden_size, 128)
    w1 = jnp.pad(w1, ((0, F_pad - input_size), (0, H_pad - hidden_size)))
    wh = jnp.stack([jnp.pad(w, ((0, H_pad - hidden_size),
                                (0, H_pad - hidden_size))) for w in wh])
    w3 = jnp.pad(w3, ((0, H_pad - hidden_size), (0, 0)))

    # bf16 weights for the MXU dots (f32 accumulation in-kernel); the head row
    # is used on the VPU and stays f32 (v5e has no bf16 VPU path).
    w1 = w1.astype(jnp.bfloat16)
    wh = wh.astype(jnp.bfloat16)
    w3_row = jnp.transpose(w3).astype(jnp.float32)   # (1, H_pad)

    return (w1, wh, w3_row, b3)


if __name__ == "__main__":
    key = jax.random.PRNGKey(0)
    k_in, k_params = jax.random.split(key)

    batch, input_size, hidden_size, num_layers = 8, 32, 100, 1
    x = jax.random.normal(k_in, (batch, input_size), dtype=jnp.float32)
    params = init_params(k_params, input_size, hidden_size, num_layers)

    out = metadata_model_forward(x, params)
    out = jax.block_until_ready(out)

    # pure-JAX reference with the exact same folded/padded/bf16 parameters
    w1, wh, w3_row, b3 = params
    x_p = jnp.pad(x, ((0, 0), (0, w1.shape[0] - x.shape[1])))
    h = jnp.maximum(jnp.dot(x_p.astype(jnp.bfloat16), w1,
                            preferred_element_type=jnp.float32), 0.0)
    for l in range(wh.shape[0]):
        h = jnp.maximum(jnp.dot(h.astype(jnp.bfloat16), wh[l],
                                preferred_element_type=jnp.float32), 0.0)
    ref = jax.nn.sigmoid(jnp.sum(h * w3_row, axis=-1, keepdims=True) + b3[0, 0])

    assert out.shape == (batch, 1)
    assert jnp.allclose(out, ref, atol=1e-4, rtol=1e-4), (
        float(jnp.max(jnp.abs(out - ref))))

    print("KERNEL_OK")
</pallas_src>

<mosaic_0001>
module attributes {stable_mosaic.version = 11 : i64} {
  func.func @_mlp_kernel(%arg0: i32, %arg1: memref<8x128xf32, #tpu.memory_space<vmem>>, %arg2: memref<128x128xbf16, #tpu.memory_space<vmem>>, %arg3: memref<1x128x128xbf16, #tpu.memory_space<vmem>>, %arg4: memref<1x128xf32, #tpu.memory_space<vmem>>, %arg5: memref<1x1xf32, #tpu.memory_space<smem>>, %arg6: memref<8x128xf32, #tpu.memory_space<vmem>>) attributes {dimension_semantics = [#tpu.dimension_semantics<parallel>], iteration_bounds = array<i64: 1>, scalar_prefetch = 0 : i64, scratch_operands = 0 : i64, tpu.core_type = #tpu.core_type<tc>, window_params = [{transform_indices = @transform_0, window_bounds = array<i64: 8, 128>}, {pipeline_mode = #tpu.pipeline_mode<synchronous>, transform_indices = @transform_1, window_bounds = array<i64: 128, 128>}, {pipeline_mode = #tpu.pipeline_mode<synchronous>, transform_indices = @transform_2, window_bounds = array<i64: 1, 128, 128>}, {pipeline_mode = #tpu.pipeline_mode<synchronous>, transform_indices = @transform_3, window_bounds = array<i64: 1, 128>}, {transform_indices = @transform_4, window_bounds = array<i64: 1, 1>}, {transform_indices = @transform_5, window_bounds = array<i64: 8, 128>}]} {
    %c0 = arith.constant 0 : index
    %c0_0 = arith.constant 0 : index
    %0 = vector.load %arg1[%c0, %c0_0] : memref<8x128xf32, #tpu.memory_space<vmem>>, vector<8x128xf32>
    %1 = arith.truncf %0 : vector<8x128xf32> to vector<8x128xbf16>
    %c0_1 = arith.constant 0 : index
    %c0_2 = arith.constant 0 : index
    %2 = vector.load %arg2[%c0_1, %c0_2] : memref<128x128xbf16, #tpu.memory_space<vmem>>, vector<128x128xbf16>
    %cst = arith.constant dense<0.000000e+00> : vector<8x128xf32>
    %3 = tpu.matmul %1, %2, %cst {dimension_numbers = #tpu.dot_dimension_numbers<[1], [0], [0], [1], [0, 0, 1, 1], [], []>} : vector<8x128xbf16>, vector<128x128xbf16>, vector<8x128xf32> -> vector<8x128xf32>
    %cst_3 = arith.constant 0.000000e+00 : f32
    %4 = vector.broadcast %cst_3 : f32 to vector<8x128xf32>
    %5 = arith.maximumf %3, %4 : vector<8x128xf32>
    %6 = arith.truncf %5 : vector<8x128xf32> to vector<8x128xbf16>
    %c0_4 = arith.constant 0 : index
    %c0_5 = arith.constant 0 : index
    %c0_6 = arith.constant 0 : index
    %7 = vector.load %arg3[%c0_4, %c0_5, %c0_6] : memref<1x128x128xbf16, #tpu.memory_space<vmem>>, vector<1x128x128xbf16>
    %8 = vector.shape_cast %7 : vector<1x128x128xbf16> to vector<128x128xbf16>
    %cst_7 = arith.constant dense<0.000000e+00> : vector<8x128xf32>
    %9 = tpu.matmul %6, %8, %cst_7 {dimension_numbers = #tpu.dot_dimension_numbers<[1], [0], [0], [1], [0, 0, 1, 1], [], []>} : vector<8x128xbf16>, vector<128x128xbf16>, vector<8x128xf32> -> vector<8x128xf32>
    %cst_8 = arith.constant 0.000000e+00 : f32
    %10 = vector.broadcast %cst_8 : f32 to vector<8x128xf32>
    %11 = arith.maximumf %9, %10 : vector<8x128xf32>
    %c0_9 = arith.constant 0 : index
    %c0_10 = arith.constant 0 : index
    %12 = vector.load %arg4[%c0_9, %c0_10] : memref<1x128xf32, #tpu.memory_space<vmem>>, vector<1x128xf32>
    %13 = vector.broadcast %12 : vector<1x128xf32> to vector<8x128xf32>
    %14 = arith.mulf %11, %13 : vector<8x128xf32>
    %cst_11 = arith.constant dense<0.000000e+00> : vector<8xf32>
    %15 = vector.multi_reduction <add>, %14, %cst_11 [1] : vector<8x128xf32> to vector<8xf32>
    %16 = vector.shape_cast %15 : vector<8xf32> to vector<8x1xf32>
    %c0_12 = arith.constant 0 : index
    %c0_13 = arith.constant 0 : index
    %17 = memref.load %arg5[%c0_12, %c0_13] : memref<1x1xf32, #tpu.memory_space<smem>>
    %18 = vector.broadcast %17 : f32 to vector<8x1xf32>
    %19 = arith.addf %16, %18 : vector<8x1xf32>
    %20 = arith.negf %19 : vector<8x1xf32>
    %21 = math.exp %20 : vector<8x1xf32>
    %cst_14 = arith.constant 1.000000e+00 : f32
    %22 = vector.broadcast %cst_14 : f32 to vector<8x1xf32>
    %23 = arith.addf %22, %21 : vector<8x1xf32>
    %24 = arith.divf %22, %23 : vector<8x1xf32>
    %25 = vector.shape_cast %24 : vector<8x1xf32> to vector<8x1xf32>
    %26 = vector.broadcast %25 : vector<8x1xf32> to vector<8x128xf32>
    %c0_15 = arith.constant 0 : index
    %c0_16 = arith.constant 0 : index
    %27 = vector.load %arg6[%c0_15, %c0_16] : memref<8x128xf32, #tpu.memory_space<vmem>>, vector<8x128xf32>
    tpu.vector_store %arg6[%c0_15, %c0_16], %26 {strides = array<i32>} : memref<8x128xf32, #tpu.memory_space<vmem>>, vector<8x128xf32>,
    return
  }
  func.func @transform_0(%arg0: i32) -> (i32, i32) {
    %c0_i32 = arith.constant 0 : i32
    %c0_i32_0 = arith.constant 0 : i32
    return %arg0, %c0_i32 : i32, i32
  }
  func.func @transform_1(%arg0: i32) -> (i32, i32) {
    %c0_i32 = arith.constant 0 : i32
    %c0_i32_0 = arith.constant 0 : i32
    %c0_i32_1 = arith.constant 0 : i32
    return %c0_i32, %c0_i32_0 : i32, i32
  }
  func.func @transform_2(%arg0: i32) -> (i32, i32, i32) {
    %c0_i32 = arith.constant 0 : i32
    %c0_i32_0 = arith.constant 0 : i32
    %c0_i32_1 = arith.constant 0 : i32
    %c0_i32_2 = arith.constant 0 : i32
    return %c0_i32, %c0_i32_0, %c0_i32_1 : i32, i32, i32
  }
  func.func @transform_3(%arg0: i32) -> (i32, i32) {
    %c0_i32 = arith.constant 0 : i32
    %c0_i32_0 = arith.constant 0 : i32
    %c0_i32_1 = arith.constant 0 : i32
    return %c0_i32, %c0_i32_0 : i32, i32
  }
  func.func @transform_4(%arg0: i32) -> (i32, i32) {
    %c0_i32 = arith.constant 0 : i32
    %c0_i32_0 = arith.constant 0 : i32
    %c0_i32_1 = arith.constant 0 : i32
    return %c0_i32, %c0_i32_0 : i32, i32
  }
  func.func @transform_5(%arg0: i32) -> (i32, i32) {
    %c0_i32 = arith.constant 0 : i32
    %c0_i32_0 = arith.constant 0 : i32
    return %arg0, %c0_i32 : i32, i32
  }
}

</mosaic_0001>

<llo_original>
// kernel: tpu_custom_call.1
$region0: #{tpu_custom_call.1}
  #allocation0 [shape = 'u32[]', space=smem, size = 0x4, offset = 0x4, fixed_abs, tag = 'smem constant byte address 0x4 - core index']
  #allocation1 [shape = 'u32[144,128]{1,0:T(1,128)}', space=vmem, size = 0x12000, scoped, tag = 'internal scratch']
  #allocation2 [shape = 'f32[1,1]{1,0:T(1,128)S(6)}', space=smem, size = 0x200, scoped, tag = 'scoped memory for tpu_custom_call.1']
  %s0 = inlined_call_operand.hbm [shape: f32[8,128], index: 0, kind: input, shape index: {}]
  %s1 = inlined_call_operand.hbm [shape: bf16[128,128], index: 1, kind: input, shape index: {}]
  %s2 = inlined_call_operand.hbm [shape: bf16[1,128,128], index: 2, kind: input, shape index: {}]
  %s3 = inlined_call_operand.vmem [shape: f32[1,128], index: 3, kind: input, shape index: {}]
  %s4 = inlined_call_operand.<no memory space> [shape: f32[1,1], index: 4, kind: input, shape index: {}]
  %s5 = inlined_call_operand.hbm [shape: f32[8,128], index: 5, kind: output, shape index: {}]
  %s6 = sld [smem:[#allocation0]]
  $region42: #{tpu_custom_call.1} parent=0
    _
  %s8 = ssub.s32 1, %s6
  %s9 = scalar_select 0, %s8, %s6
  %10 = sst [smem:[#allocation2]] %s4
  $region1: #{tpu_custom_call.1} parent=0
    #allocation3 [shape = 'u8[4096]{0}', space=vmem, size = 0x1000, scoped, tag = 'input window, operand 0, single buffered']
    #allocation4 [shape = 's32[1]{0}', space=sflag, size = 0x4, scoped, tag = 'scoped memory for tpu_custom_call.1']
    #allocation5 [shape = 's32[1]{0}', space=sflag, size = 0x4, scoped, tag = 'scoped memory for tpu_custom_call.1']
    #allocation6 [shape = 'u8[32768]{0}', space=vmem, size = 0x8000, scoped, tag = 'input window, operand 1, single buffered']
    #allocation7 [shape = 's32[1]{0}', space=sflag, size = 0x4, scoped, tag = 'scoped memory for tpu_custom_call.1']
    #allocation8 [shape = 'u8[32768]{0}', space=vmem, size = 0x8000, scoped, tag = 'input window, operand 2, single buffered']
    #allocation9 [shape = 'u8[4096]{0}', space=vmem, size = 0x1000, scoped, tag = 'output window, operand 0, single buffered']
    %11 = vsyncpa [#allocation4], 0
    %12 = vsyncpa [#allocation7], 0
    %13 = vsyncpa [#allocation5], 0
    // Predicated region
    $region2: #{tpu_custom_call.1} parent=1 // pred_check
      _
    $region3: #{tpu_custom_call.1} parent=1 // pred_check_branch
      %15 = sbr.rel (0) target = $region5
    $region4: #{tpu_custom_call.1} parent=1 // pred_region
      %s17 = ssub.s32 128, 128
      %18 = vsyncadd [#allocation4], %s17
      %s20 = sshll.u32 [#allocation3], 4
      %s21 = int_to_ptr.vmem [resolvable:$true] %s20
      %23 = dma.hbm_to_vmem [thread:$0]  %s0, 128, %s21, [#allocation4]
    $region5: #{tpu_custom_call.1} parent=1 // pred_fallthru
      _
    // Predicated region
    $region6: #{tpu_custom_call.1} parent=1 // pred_check
      _
    $region7: #{tpu_custom_call.1} parent=1 // pred_check_branch
      %25 = sbr.rel (0) target = $region9
    $region8: #{tpu_custom_call.1} parent=1 // pred_region
      %s27 = ssub.s32 1024, 1024
      %28 = vsyncadd [#allocation7], %s27
      %s29 = sshll.u32 [#allocation6], 4
      %s30 = int_to_ptr.vmem [resolvable:$true] %s29
      %35 = dma.hbm_to_vmem [thread:$0]  %s1, 1024, %s30, [#allocation7], 64, 64, 4
    $region9: #{tpu_custom_call.1} parent=1 // pred_fallthru
      _
    // Predicated region
    $region10: #{tpu_custom_call.1} parent=1 // pred_check
      _
    $region11: #{tpu_custom_call.1} parent=1 // pred_check_branch
      %37 = sbr.rel (0) target = $region13
    $region12: #{tpu_custom_call.1} parent=1 // pred_region
      %s39 = ssub.s32 1024, 1024
      %40 = vsyncadd [#allocation7], %s39
      %s41 = sshll.u32 [#allocation8], 4
      %s42 = int_to_ptr.vmem [resolvable:$true] %s41
      %47 = dma.hbm_to_vmem [thread:$0]  %s2, 1024, %s42, [#allocation7], 64, 64, 4
    $region13: #{tpu_custom_call.1} parent=1 // pred_fallthru
      _
    // Predicated region
    $region14: #{tpu_custom_call.1} parent=1 // pred_check
      _
    $region15: #{tpu_custom_call.1} parent=1 // pred_check_branch
      %49 = sbr.rel (0) target = $region17
    $region16: #{tpu_custom_call.1} parent=1 // pred_region
      _
    $region17: #{tpu_custom_call.1} parent=1 // pred_fallthru
      _
    // Predicated region
    $region18: #{tpu_custom_call.1} parent=1 // pred_check
      _
    $region19: #{tpu_custom_call.1} parent=1 // pred_check_branch
      %51 = sbr.rel (0) target = $region21
    $region20: #{tpu_custom_call.1} parent=1 // pred_region
      _
    $region21: #{tpu_custom_call.1} parent=1 // pred_fallthru
      _
    // Predicated region
    $region22: #{tpu_custom_call.1} parent=1 // pred_check
      _
    $region23: #{tpu_custom_call.1} parent=1 // pred_check_branch
      %53 = sbr.rel (0) target = $region25
    $region24: #{tpu_custom_call.1} parent=1 // pred_region
      %54 = dma.done [#allocation4], 128
    $region25: #{tpu_custom_call.1} parent=1 // pred_fallthru
      _
    // Predicated region
    $region26: #{tpu_custom_call.1} parent=1 // pred_check
      _
    $region27: #{tpu_custom_call.1} parent=1 // pred_check_branch
      %56 = sbr.rel (0) target = $region29
    $region28: #{tpu_custom_call.1} parent=1 // pred_region
      %57 = dma.done [#allocation7], 1024
    $region29: #{tpu_custom_call.1} parent=1 // pred_fallthru
      _
    // Predicated region
    $region30: #{tpu_custom_call.1} parent=1 // pred_check
      _
    $region31: #{tpu_custom_call.1} parent=1 // pred_check_branch
      %59 = sbr.rel (0) target = $region33
    $region32: #{tpu_custom_call.1} parent=1 // pred_region
      %60 = dma.done [#allocation7], 1024
    $region33: #{tpu_custom_call.1} parent=1 // pred_fallthru
      _
    %v62 = vld [vmem:[#allocation3] sm:$0xff]
    %v63 = vpack.c.bf16 %v62, %v62
    %v64 = vld [vmem:[#allocation6] sm:$0xf]
    %v65 = vld [vmem:[#allocation6 + $0x4] sm:$0xf]
    %v66 = vld [vmem:[#allocation6 + $0x8] sm:$0xf]
    %v67 = vld [vmem:[#allocation6 + $0xc] sm:$0xf]
    %v68 = vld [vmem:[#allocation6 + $0x10] sm:$0xf]
    %v69 = vld [vmem:[#allocation6 + $0x14] sm:$0xf]
    %v70 = vld [vmem:[#allocation6 + $0x18] sm:$0xf]
    %v71 = vld [vmem:[#allocation6 + $0x1c] sm:$0xf]
    %v72 = vld [vmem:[#allocation6 + $0x20] sm:$0xf]
    %v73 = vld [vmem:[#allocation6 + $0x24] sm:$0xf]
    %v74 = vld [vmem:[#allocation6 + $0x28] sm:$0xf]
    %v75 = vld [vmem:[#allocation6 + $0x2c] sm:$0xf]
    %v76 = vld [vmem:[#allocation6 + $0x30] sm:$0xf]
    %v77 = vld [vmem:[#allocation6 + $0x34] sm:$0xf]
    %v78 = vld [vmem:[#allocation6 + $0x38] sm:$0xf]
    %v79 = vld [vmem:[#allocation6 + $0x3c] sm:$0xf]
    %v96 = vunpack.c.l.b16 %v64
    %v97 = vunpack.c.l.b16 %v65
    %v98 = vunpack.c.l.b16 %v66
    %v99 = vunpack.c.l.b16 %v67
    %v100 = vunpack.c.l.b16 %v68
    %v101 = vunpack.c.l.b16 %v69
    %v102 = vunpack.c.l.b16 %v70
    %v103 = vunpack.c.l.b16 %v71
    %v104 = vunpack.c.l.b16 %v72
    %v105 = vunpack.c.l.b16 %v73
    %v106 = vunpack.c.l.b16 %v74
    %v107 = vunpack.c.l.b16 %v75
    %v108 = vunpack.c.l.b16 %v76
    %v109 = vunpack.c.l.b16 %v77
    %v110 = vunpack.c.l.b16 %v78
    %v111 = vunpack.c.l.b16 %v79
    %v112 = vpack.c.b16 %v97, %v96
    %v113 = vpack.c.b16 %v99, %v98
    %v114 = vpack.c.b16 %v101, %v100
    %v115 = vpack.c.b16 %v103, %v102
    %v116 = vpack.c.b16 %v105, %v104
    %v117 = vpack.c.b16 %v107, %v106
    %v118 = vpack.c.b16 %v109, %v108
    %v119 = vpack.c.b16 %v111, %v110
    %128 = vmatprep.subr.bf16.mxu0 0
    %129 = vmatpush1.bf16.msra.mxu0 %v112
    %130 = vmatprep.subr.bf16.mxu0 0
    %131 = vmatpush1.bf16.msra.mxu0 %v113
    %132 = vmatprep.subr.bf16.mxu0 0
    %133 = vmatpush1.bf16.msra.mxu0 %v114
    %134 = vmatprep.subr.bf16.mxu0 0
    %135 = vmatpush1.bf16.msra.mxu0 %v115
    %136 = vmatprep.subr.bf16.mxu0 0
    %137 = vmatpush1.bf16.msra.mxu0 %v116
    %138 = vmatprep.subr.bf16.mxu0 0
    %139 = vmatpush1.bf16.msra.mxu0 %v117
    %140 = vmatprep.subr.bf16.mxu0 0
    %141 = vmatpush1.bf16.msra.mxu0 %v118
    %142 = vmatprep.subr.bf16.mxu0 0
    %143 = vmatpush1.bf16.msra.mxu0 %v119
    %144 = vmatprep.subr.bf16.mxu0 0
    %145 = vmatpush1.bf16.msra.mxu0 0
    %146 = vmatprep.subr.bf16.mxu0 0
    %147 = vmatpush1.bf16.msra.mxu0 0
    %148 = vmatprep.subr.bf16.mxu0 0
    %149 = vmatpush1.bf16.msra.mxu0 0
    %150 = vmatprep.subr.bf16.mxu0 0
    %151 = vmatpush1.bf16.msra.mxu0 0
    %152 = vmatprep.subr.bf16.mxu0 0
    %153 = vmatpush1.bf16.msra.mxu0 0
    %154 = vmatprep.subr.bf16.mxu0 0
    %155 = vmatpush1.bf16.msra.mxu0 0
    %156 = vmatprep.subr.bf16.mxu0 0
    %157 = vmatpush1.bf16.msra.mxu0 0
    %158 = vmatprep.subr.bf16.mxu0 0
    %159 = vmatpush1.bf16.msra.mxu0 0
    %160 = vmatprep.mubr.bf16.mxu0 0
    %161 = vmatmul.mubr.bf16.gmra.mrb[0].mxu0 %v63
    %v162 = vpop.f32.mrb[0].mxu0
    %v163 = vadd.f32 0.0, %v162
    %v164 = vpop.f32.mrb[0].mxu0
    %v165 = vpop.f32.mrb[0].mxu0
    %v166 = vpop.f32.mrb[0].mxu0
    %167 = vdwg.mxu0
    %v168 = vmax.f32 %v163, 0.0
    %v169 = vpack.c.bf16 %v168, %v168
    %v170 = vld [vmem:[#allocation8] sm:$0xf]
    %v171 = vld [vmem:[#allocation8 + $0x4] sm:$0xf]
    %v172 = vld [vmem:[#allocation8 + $0x8] sm:$0xf]
    %v173 = vld [vmem:[#allocation8 + $0xc] sm:$0xf]
    %v174 = vld [vmem:[#allocation8 + $0x10] sm:$0xf]
    %v175 = vld [vmem:[#allocation8 + $0x14] sm:$0xf]
    %v176 = vld [vmem:[#allocation8 + $0x18] sm:$0xf]
    %v177 = vld [vmem:[#allocation8 + $0x1c] sm:$0xf]
    %v178 = vld [vmem:[#allocation8 + $0x20] sm:$0xf]
    %v179 = vld [vmem:[#allocation8 + $0x24] sm:$0xf]
    %v180 = vld [vmem:[#allocation8 + $0x28] sm:$0xf]
    %v181 = vld [vmem:[#allocation8 + $0x2c] sm:$0xf]
    %v182 = vld [vmem:[#allocation8 + $0x30] sm:$0xf]
    %v183 = vld [vmem:[#allocation8 + $0x34] sm:$0xf]
    %v184 = vld [vmem:[#allocation8 + $0x38] sm:$0xf]
    %v185 = vld [vmem:[#allocation8 + $0x3c] sm:$0xf]
    %v202 = vunpack.c.l.b16 %v170
    %v203 = vunpack.c.l.b16 %v171
    %v204 = vunpack.c.l.b16 %v172
    %v205 = vunpack.c.l.b16 %v173
    %v206 = vunpack.c.l.b16 %v174
    %v207 = vunpack.c.l.b16 %v175
    %v208 = vunpack.c.l.b16 %v176
    %v209 = vunpack.c.l.b16 %v177
    %v210 = vunpack.c.l.b16 %v178
    %v211 = vunpack.c.l.b16 %v179
    %v212 = vunpack.c.l.b16 %v180
    %v213 = vunpack.c.l.b16 %v181
    %v214 = vunpack.c.l.b16 %v182
    %v215 = vunpack.c.l.b16 %v183
    %v216 = vunpack.c.l.b16 %v184
    %v217 = vunpack.c.l.b16 %v185
    %v218 = vpack.c.b16 %v203, %v202
    %v219 = vpack.c.b16 %v205, %v204
    %v220 = vpack.c.b16 %v207, %v206
    %v221 = vpack.c.b16 %v209, %v208
    %v222 = vpack.c.b16 %v211, %v210
    %v223 = vpack.c.b16 %v213, %v212
    %v224 = vpack.c.b16 %v215, %v214
    %v225 = vpack.c.b16 %v217, %v216
    %234 = vmatprep.subr.bf16.mxu0 0
    %235 = vmatpush1.bf16.msra.mxu0 %v218
    %236 = vmatprep.subr.bf16.mxu0 0
    %237 = vmatpush1.bf16.msra.mxu0 %v219
    %238 = vmatprep.subr.bf16.mxu0 0
    %239 = vmatpush1.bf16.msra.mxu0 %v220
    %240 = vmatprep.subr.bf16.mxu0 0
    %241 = vmatpush1.bf16.msra.mxu0 %v221
    %242 = vmatprep.subr.bf16.mxu0 0
    %243 = vmatpush1.bf16.msra.mxu0 %v222
    %244 = vmatprep.subr.bf16.mxu0 0
    %245 = vmatpush1.bf16.msra.mxu0 %v223
    %246 = vmatprep.subr.bf16.mxu0 0
    %247 = vmatpush1.bf16.msra.mxu0 %v224
    %248 = vmatprep.subr.bf16.mxu0 0
    %249 = vmatpush1.bf16.msra.mxu0 %v225
    %250 = vmatprep.subr.bf16.mxu0 0
    %251 = vmatpush1.bf16.msra.mxu0 0
    %252 = vmatprep.subr.bf16.mxu0 0
    %253 = vmatpush1.bf16.msra.mxu0 0
    %254 = vmatprep.subr.bf16.mxu0 0
    %255 = vmatpush1.bf16.msra.mxu0 0
    %256 = vmatprep.subr.bf16.mxu0 0
    %257 = vmatpush1.bf16.msra.mxu0 0
    %258 = vmatprep.subr.bf16.mxu0 0
    %259 = vmatpush1.bf16.msra.mxu0 0
    %260 = vmatprep.subr.bf16.mxu0 0
    %261 = vmatpush1.bf16.msra.mxu0 0
    %262 = vmatprep.subr.bf16.mxu0 0
    %263 = vmatpush1.bf16.msra.mxu0 0
    %264 = vmatprep.subr.bf16.mxu0 0
    %265 = vmatpush1.bf16.msra.mxu0 0
    %266 = vmatprep.mubr.bf16.mxu0 0
    %267 = vmatmul.mubr.bf16.gmra.mrb[0].mxu0 %v169
    %v268 = vpop.f32.mrb[0].mxu0
    %v269 = vadd.f32 0.0, %v268
    %v270 = vpop.f32.mrb[0].mxu0
    %v271 = vpop.f32.mrb[0].mxu0
    %v272 = vpop.f32.mrb[0].mxu0
    %273 = vdwg.mxu0
    %v274 = vmax.f32 %v269, 0.0
    %v275 = vld [vmem:[%s3] sm:$0x1]
    %v277 = vlaneseq
    %v278 = vshrl.u32 %v277, 7
    %v279 = vsub.s32 0, %v278
    %v280 = vrot.slane %v275, %v279
    %v282 = vmul.f32 %v274, %v280
    %283 = vadd.xlane.f32.xlu0 %v282
    %v284 = vpop.xlane.xlu0 %283
    %s285 = sld [smem:[#allocation2]]
    %v286 = vstv %s285
    %v287 = vadd.f32 %v284, %v286
    %v288 = vxor.u32 %v287, 2147483648
    %v289 = vmul.f32 %v288, 1.442695
    %v290 = vpow.pop %v289
    %v291 = vadd.f32 %v290, 1.0
    %v292 = vrcp.pop %v291
    %v293 = vmul.f32 1.0, %v292
    %294 = vst [vmem:[#allocation9] sm:$0xff] %v293
    // Predicated region
    $region34: #{tpu_custom_call.1} parent=1 // pred_check
      _
    $region35: #{tpu_custom_call.1} parent=1 // pred_check_branch
      %296 = sbr.rel (0) target = $region37
    $region36: #{tpu_custom_call.1} parent=1 // pred_region
      %s298 = ssub.s32 128, 128
      %299 = vsyncadd [#allocation5], %s298
      %s301 = sshll.u32 [#allocation9], 4
      %s302 = int_to_ptr.vmem [resolvable:$true] %s301
      %304 = dma.vmem_to_hbm [thread:$0]  %s302, 128, %s5, [#allocation5]
    $region37: #{tpu_custom_call.1} parent=1 // pred_fallthru
      _
    // Predicated region
    $region38: #{tpu_custom_call.1} parent=1 // pred_check
      _
    $region39: #{tpu_custom_call.1} parent=1 // pred_check_branch
      %306 = sbr.rel (0) target = $region41
    $region40: #{tpu_custom_call.1} parent=1 // pred_region
      %307 = dma.done [#allocation5], 128
    $region41: #{tpu_custom_call.1} parent=1 // pred_fallthru
      _
    %308 = vsyncpa [#allocation4], 1
    %309 = vsyncpa [#allocation7], 1
    %310 = vsyncpa [#allocation5], 1

</llo_original>
